<compile_context>
chip_gen: v7x
topology: tpu7x:2x2x1
jax: 0.10.0
libtpu: 0.0.40
codegen_flags: <defaults>
</compile_context>

<pallas_src>
import functools

import jax
import jax.numpy as jnp
from jax.experimental import pallas as pl
from jax.experimental.pallas import tpu as pltpu

OBS_DIM = 2       # MountainCar-v0 observation: (position, velocity)
HIDDEN = 64       # SB3 MlpPolicy default pi net_arch = [64, 64]
N_ACTIONS = 3     # MountainCar-v0 discrete actions
K1 = 8            # layer-1 contraction, zero-padded: rows = [obs(2), ones(1), zeros(5)]
A_PAD = 8         # action rows padded to one full sublane tile for the final matmul


def _round_up(x, m):
    return ((x + m - 1) // m) * m


def _choose_tile(batch, tb):
    """Pad batch only to the 128-lane width; pick a tile that keeps >=2 grid steps."""
    bp = _round_up(batch, 128)
    tb = max(128, min(_round_up(tb, 128), bp))
    # v7x: the "parallel" batch axis shards grid steps across the 2 TensorCores; make
    # sure there are at least 2 steps whenever the (padded) batch allows it.
    if bp >= 256 and pl.cdiv(bp, tb) < 2:
        tb = _round_up(bp // 2, 128)
    return bp, tb


def _policy_logprob_kernel(obs_ref, act_ref, w1_ref, w2_ref, b2_ref, w3_ref, b3_ref,
                           out_ref, *, act_dtype):
    # obs_ref: (K1, TB)  matmul_dtype   rows = [pos, vel, 1, 0...0], batch on lanes
    # act_ref: (1, TB)   int32
    # w1_ref : (HIDDEN, K1)      matmul_dtype   cols = [w1.T, b1, 0...0]  (bias folded)
    # w2_ref : (HIDDEN, HIDDEN)  matmul_dtype
    # b2_ref : (HIDDEN, 1)       f32
    # w3_ref : (A_PAD, HIDDEN)   matmul_dtype   rows >= N_ACTIONS are zero (unused)
    # b3_ref : (A_PAD, 1)        f32
    # out_ref: (1, TB)           f32

    # ---- layer 1 on the MXU (bias folded in via the ones row), f32 accumulate ----
    h1_pre = jnp.dot(w1_ref[...], obs_ref[...], preferred_element_type=jnp.float32)
    h1 = jnp.tanh(h1_pre.astype(act_dtype))                       # (HIDDEN, TB)

    # ---- layers 2/3 on the MXU; tanh in act_dtype (bf16 on v6e/v7x fast path) ----
    h2_pre = jnp.dot(w2_ref[...], h1, preferred_element_type=jnp.float32) + b2_ref[...]
    h2 = jnp.tanh(h2_pre.astype(act_dtype))                       # (HIDDEN, TB)

    logits = (jnp.dot(w3_ref[...], h2, preferred_element_type=jnp.float32)
              + b3_ref[...])                                      # (A_PAD, TB) f32

    # ---- fused stable log-softmax + gather over the N_ACTIONS explicit rows (f32) ----
    rows = [logits[a:a + 1, :] for a in range(N_ACTIONS)]         # each (1, TB)
    m = rows[0]
    for r in rows[1:]:
        m = jnp.maximum(m, r)
    se = jnp.exp(rows[0] - m)
    for r in rows[1:]:
        se = se + jnp.exp(r - m)
    lse = m + jnp.log(se)

    act = act_ref[...]                                            # (1, TB) int32
    # NOTE: out-of-range action ids fall through to the last action row (padded lanes use
    # action 0 and are sliced off by the wrapper); PyTorch's Categorical would raise.
    sel = rows[N_ACTIONS - 1]
    for a in range(N_ACTIONS - 2, -1, -1):
        sel = jnp.where(act == a, rows[a], sel)
    out_ref[...] = sel - lse                                      # (1, TB) lane-dense store


def policy_log_prob(obs, actions, params, *, tb=2048, matmul_dtype=jnp.bfloat16,
                    tanh_dtype=None):
    """obs: (B, OBS_DIM) f32, actions: (B,) int -> (B,) f32 log-probs.

    Fast path (v6e/v7x): matmul_dtype=bf16 with bf16 tanh.  On v5e (no bf16 VPU/EUP)
    pass tanh_dtype=jnp.float32; for a near-exact check pass matmul_dtype=jnp.float32.
    tb is the batch tile (multiple of 128); the default 2048 stays well under v5e's
    16 MiB scoped-VMEM default -- only raise vmem_limit_bytes if you push it past ~8K.
    """
    if tanh_dtype is None:
        tanh_dtype = matmul_dtype
    B = obs.shape[0]
    w1, b1, w2, b2, w3, b3 = params

    Bp, tb = _choose_tile(B, tb)
    n_tiles = pl.cdiv(Bp, tb)

    # ---- layout plumbing only (no compute hoisted out of the kernel) ----
    if Bp != B:
        obs = jnp.pad(obs, ((0, Bp - B), (0, 0)))
        actions = jnp.pad(actions, (0, Bp - B))
    # augmented, feature-major obs: rows = [obs.T ; ones ; zero-pad to K1]
    obs_aug = jnp.concatenate([obs, jnp.ones((Bp, 1), obs.dtype)], axis=1)
    obs_aug = jnp.pad(obs_aug, ((0, 0), (0, K1 - (OBS_DIM + 1))))
    obs_aug = obs_aug.T.astype(matmul_dtype)                      # (K1, Bp)
    act_row = actions.astype(jnp.int32).reshape(1, Bp)            # (1, Bp)
    # layer-1 weight with bias folded in as an extra column, zero-padded to K1
    w1a = jnp.concatenate([w1.T, b1.reshape(HIDDEN, 1)], axis=1)
    w1a = jnp.pad(w1a, ((0, 0), (0, K1 - (OBS_DIM + 1)))).astype(matmul_dtype)
    w2t = w2.T.astype(matmul_dtype)                               # (HIDDEN, HIDDEN)
    w3t = jnp.pad(w3.T, ((0, A_PAD - N_ACTIONS), (0, 0))).astype(matmul_dtype)
    b2c = b2.reshape(HIDDEN, 1)                                   # f32, added to f32 acc
    b3c = jnp.pad(b3.reshape(N_ACTIONS, 1), ((0, A_PAD - N_ACTIONS), (0, 0)))

    out = pl.pallas_call(
        functools.partial(_policy_logprob_kernel, act_dtype=tanh_dtype),
        out_shape=jax.ShapeDtypeStruct((1, Bp), jnp.float32),
        grid=(n_tiles,),
        in_specs=[
            # batch-tiled operands (Bp need not be a multiple of tb: last block partial)
            pl.BlockSpec((K1, tb), lambda i: (0, i)),
            pl.BlockSpec((1, tb), lambda i: (0, i)),
            # weights/biases: constant index_map -> VMEM-resident, no per-step re-DMA
            pl.BlockSpec((HIDDEN, K1), lambda i: (0, 0)),
            pl.BlockSpec((HIDDEN, HIDDEN), lambda i: (0, 0)),
            pl.BlockSpec((HIDDEN, 1), lambda i: (0, 0)),
            pl.BlockSpec((A_PAD, HIDDEN), lambda i: (0, 0)),
            pl.BlockSpec((A_PAD, 1), lambda i: (0, 0)),
        ],
        out_specs=pl.BlockSpec((1, tb), lambda i: (0, i)),
        compiler_params=pltpu.CompilerParams(
            dimension_semantics=("parallel",)),   # dual-TC sharding on v7x; no-op on v5e/v6e
    )(obs_aug, act_row, w1a, w2t, b2c, w3t, b3c)

    return out.reshape(Bp)[:B]


def init_params(key):
    """Deterministic synthetic weights with the SB3 MlpPolicy shapes."""
    ks = jax.random.split(key, 6)
    scale = 0.15
    w1 = scale * jax.random.normal(ks[0], (OBS_DIM, HIDDEN), jnp.float32)
    b1 = scale * jax.random.normal(ks[1], (HIDDEN,), jnp.float32)
    w2 = scale * jax.random.normal(ks[2], (HIDDEN, HIDDEN), jnp.float32)
    b2 = scale * jax.random.normal(ks[3], (HIDDEN,), jnp.float32)
    w3 = scale * jax.random.normal(ks[4], (HIDDEN, N_ACTIONS), jnp.float32)
    b3 = scale * jax.random.normal(ks[5], (N_ACTIONS,), jnp.float32)
    return (w1, b1, w2, b2, w3, b3)


def reference_log_prob(obs, actions, params):
    w1, b1, w2, b2, w3, b3 = params
    h1 = jnp.tanh(obs @ w1 + b1)
    h2 = jnp.tanh(h1 @ w2 + b2)
    logits = h2 @ w3 + b3
    logp_all = jax.nn.log_softmax(logits, axis=-1)
    return jnp.take_along_axis(logp_all, actions.reshape(-1, 1), axis=1).reshape(-1)


if __name__ == "__main__":
    key = jax.random.PRNGKey(0)
    k_obs, k_act, k_par = jax.random.split(key, 3)

    # B not a multiple of 128: exercises pad-to-128, the 2-tile split, and the
    # partial-last-block path (Bp=384, tb=256 -> blocks of 256 and 128).
    B = 300
    obs = jax.random.normal(k_obs, (B, OBS_DIM), jnp.float32)
    actions = jax.random.randint(k_act, (B,), 0, N_ACTIONS, jnp.int32)
    params = init_params(k_par)

    ref = reference_log_prob(obs, actions, params)

    # Near-exact path (f32 matmuls + f32 tanh).
    logp_f32 = policy_log_prob(obs, actions, params, matmul_dtype=jnp.float32)
    jax.block_until_ready(logp_f32)
    assert logp_f32.shape == (B,)
    err_f32 = float(jnp.max(jnp.abs(logp_f32 - ref)))
    assert jnp.allclose(logp_f32, ref, atol=2e-2, rtol=2e-2), ("f32 path mismatch", err_f32)

    # Fast path (bf16 MXU inputs, bf16 tanh, f32 accumulation / softmax).
    logp_bf16 = policy_log_prob(obs, actions, params)
    jax.block_until_ready(logp_bf16)
    err_bf16 = float(jnp.max(jnp.abs(logp_bf16 - ref)))
    assert jnp.allclose(logp_bf16, ref, atol=5e-2, rtol=5e-2), ("bf16 path mismatch", err_bf16)

    print("KERNEL_OK")
</pallas_src>

<mosaic_0001>
module attributes {stable_mosaic.version = 11 : i64} {
  func.func @_policy_logprob_kernel(%arg0: i32, %arg1: memref<8x256xf32, #tpu.memory_space<vmem>>, %arg2: memref<1x256xi32, #tpu.memory_space<vmem>>, %arg3: memref<64x8xf32, #tpu.memory_space<vmem>>, %arg4: memref<64x64xf32, #tpu.memory_space<vmem>>, %arg5: memref<64x1xf32, #tpu.memory_space<vmem>>, %arg6: memref<8x64xf32, #tpu.memory_space<vmem>>, %arg7: memref<8x1xf32, #tpu.memory_space<vmem>>, %arg8: memref<1x256xf32, #tpu.memory_space<vmem>>) attributes {dimension_semantics = [#tpu.dimension_semantics<parallel>], iteration_bounds = array<i64: 2>, scalar_prefetch = 0 : i64, scratch_operands = 0 : i64, tpu.core_type = #tpu.core_type<tc>, window_params = [{transform_indices = @transform_0, window_bounds = array<i64: 8, 256>}, {transform_indices = @transform_1, window_bounds = array<i64: 1, 256>}, {pipeline_mode = #tpu.pipeline_mode<synchronous>, transform_indices = @transform_2, window_bounds = array<i64: 64, 8>}, {pipeline_mode = #tpu.pipeline_mode<synchronous>, transform_indices = @transform_3, window_bounds = array<i64: 64, 64>}, {pipeline_mode = #tpu.pipeline_mode<synchronous>, transform_indices = @transform_4, window_bounds = array<i64: 64, 1>}, {pipeline_mode = #tpu.pipeline_mode<synchronous>, transform_indices = @transform_5, window_bounds = array<i64: 8, 64>}, {pipeline_mode = #tpu.pipeline_mode<synchronous>, transform_indices = @transform_6, window_bounds = array<i64: 8, 1>}, {transform_indices = @transform_7, window_bounds = array<i64: 1, 256>}]} {
    %c0 = arith.constant 0 : index
    %c0_0 = arith.constant 0 : index
    %0 = vector.load %arg3[%c0, %c0_0] : memref<64x8xf32, #tpu.memory_space<vmem>>, vector<64x8xf32>
    %c0_1 = arith.constant 0 : index
    %c0_2 = arith.constant 0 : index
    %1 = vector.load %arg1[%c0_1, %c0_2] : memref<8x256xf32, #tpu.memory_space<vmem>>, vector<8x256xf32>
    %cst = arith.constant dense<0.000000e+00> : vector<64x256xf32>
    %2 = tpu.matmul %0, %1, %cst {dimension_numbers = #tpu.dot_dimension_numbers<[1], [0], [0], [1], [0, 0, 1, 1], [], []>} : vector<64x8xf32>, vector<8x256xf32>, vector<64x256xf32> -> vector<64x256xf32>
    %3 = math.tanh %2 : vector<64x256xf32>
    %c0_3 = arith.constant 0 : index
    %c0_4 = arith.constant 0 : index
    %4 = vector.load %arg4[%c0_3, %c0_4] : memref<64x64xf32, #tpu.memory_space<vmem>>, vector<64x64xf32>
    %cst_5 = arith.constant dense<0.000000e+00> : vector<64x256xf32>
    %5 = tpu.matmul %4, %3, %cst_5 {dimension_numbers = #tpu.dot_dimension_numbers<[1], [0], [0], [1], [0, 0, 1, 1], [], []>} : vector<64x64xf32>, vector<64x256xf32>, vector<64x256xf32> -> vector<64x256xf32>
    %c0_6 = arith.constant 0 : index
    %c0_7 = arith.constant 0 : index
    %6 = vector.load %arg5[%c0_6, %c0_7] : memref<64x1xf32, #tpu.memory_space<vmem>>, vector<64x1xf32>
    %7 = vector.broadcast %6 : vector<64x1xf32> to vector<64x256xf32>
    %8 = arith.addf %5, %7 : vector<64x256xf32>
    %9 = math.tanh %8 : vector<64x256xf32>
    %c0_8 = arith.constant 0 : index
    %c0_9 = arith.constant 0 : index
    %10 = vector.load %arg6[%c0_8, %c0_9] : memref<8x64xf32, #tpu.memory_space<vmem>>, vector<8x64xf32>
    %cst_10 = arith.constant dense<0.000000e+00> : vector<8x256xf32>
    %11 = tpu.matmul %10, %9, %cst_10 {dimension_numbers = #tpu.dot_dimension_numbers<[1], [0], [0], [1], [0, 0, 1, 1], [], []>} : vector<8x64xf32>, vector<64x256xf32>, vector<8x256xf32> -> vector<8x256xf32>
    %c0_11 = arith.constant 0 : index
    %c0_12 = arith.constant 0 : index
    %12 = vector.load %arg7[%c0_11, %c0_12] : memref<8x1xf32, #tpu.memory_space<vmem>>, vector<8x1xf32>
    %13 = vector.broadcast %12 : vector<8x1xf32> to vector<8x256xf32>
    %14 = arith.addf %11, %13 : vector<8x256xf32>
    %15 = vector.extract_strided_slice %14 {offsets = [0, 0], sizes = [1, 256], strides = [1, 1]} : vector<8x256xf32> to vector<1x256xf32>
    %16 = vector.extract_strided_slice %14 {offsets = [1, 0], sizes = [1, 256], strides = [1, 1]} : vector<8x256xf32> to vector<1x256xf32>
    %17 = vector.extract_strided_slice %14 {offsets = [2, 0], sizes = [1, 256], strides = [1, 1]} : vector<8x256xf32> to vector<1x256xf32>
    %18 = arith.maximumf %15, %16 : vector<1x256xf32>
    %19 = arith.maximumf %18, %17 : vector<1x256xf32>
    %20 = arith.subf %15, %19 : vector<1x256xf32>
    %21 = math.exp %20 : vector<1x256xf32>
    %22 = arith.subf %16, %19 : vector<1x256xf32>
    %23 = math.exp %22 : vector<1x256xf32>
    %24 = arith.addf %21, %23 : vector<1x256xf32>
    %25 = arith.subf %17, %19 : vector<1x256xf32>
    %26 = math.exp %25 : vector<1x256xf32>
    %27 = arith.addf %24, %26 : vector<1x256xf32>
    %28 = math.log %27 : vector<1x256xf32>
    %29 = arith.addf %19, %28 : vector<1x256xf32>
    %c0_13 = arith.constant 0 : index
    %c0_14 = arith.constant 0 : index
    %30 = vector.load %arg2[%c0_13, %c0_14] : memref<1x256xi32, #tpu.memory_space<vmem>>, vector<1x256xi32>
    %c1_i32 = arith.constant 1 : i32
    %31 = vector.broadcast %c1_i32 : i32 to vector<1x256xi32>
    %32 = arith.cmpi eq, %30, %31 : vector<1x256xi32>
    %33 = arith.select %32, %16, %17 : vector<1x256xi1>, vector<1x256xf32>
    %c0_i32 = arith.constant 0 : i32
    %34 = vector.broadcast %c0_i32 : i32 to vector<1x256xi32>
    %35 = arith.cmpi eq, %30, %34 : vector<1x256xi32>
    %36 = arith.select %35, %15, %33 : vector<1x256xi1>, vector<1x256xf32>
    %37 = arith.subf %36, %29 : vector<1x256xf32>
    %c0_15 = arith.constant 0 : index
    %c0_16 = arith.constant 0 : index
    %38 = vector.load %arg8[%c0_15, %c0_16] : memref<1x256xf32, #tpu.memory_space<vmem>>, vector<1x256xf32>
    tpu.vector_store %arg8[%c0_15, %c0_16], %37 {strides = array<i32>} : memref<1x256xf32, #tpu.memory_space<vmem>>, vector<1x256xf32>,
    return
  }
  func.func @transform_0(%arg0: i32) -> (i32, i32) {
    %c0_i32 = arith.constant 0 : i32
    %c0_i32_0 = arith.constant 0 : i32
    return %c0_i32, %arg0 : i32, i32
  }
  func.func @transform_1(%arg0: i32) -> (i32, i32) {
    %c0_i32 = arith.constant 0 : i32
    %c0_i32_0 = arith.constant 0 : i32
    return %c0_i32, %arg0 : i32, i32
  }
  func.func @transform_2(%arg0: i32) -> (i32, i32) {
    %c0_i32 = arith.constant 0 : i32
    %c0_i32_0 = arith.constant 0 : i32
    %c0_i32_1 = arith.constant 0 : i32
    return %c0_i32, %c0_i32_0 : i32, i32
  }
  func.func @transform_3(%arg0: i32) -> (i32, i32) {
    %c0_i32 = arith.constant 0 : i32
    %c0_i32_0 = arith.constant 0 : i32
    %c0_i32_1 = arith.constant 0 : i32
    return %c0_i32, %c0_i32_0 : i32, i32
  }
  func.func @transform_4(%arg0: i32) -> (i32, i32) {
    %c0_i32 = arith.constant 0 : i32
    %c0_i32_0 = arith.constant 0 : i32
    %c0_i32_1 = arith.constant 0 : i32
    return %c0_i32, %c0_i32_0 : i32, i32
  }
  func.func @transform_5(%arg0: i32) -> (i32, i32) {
    %c0_i32 = arith.constant 0 : i32
    %c0_i32_0 = arith.constant 0 : i32
    %c0_i32_1 = arith.constant 0 : i32
    return %c0_i32, %c0_i32_0 : i32, i32
  }
  func.func @transform_6(%arg0: i32) -> (i32, i32) {
    %c0_i32 = arith.constant 0 : i32
    %c0_i32_0 = arith.constant 0 : i32
    %c0_i32_1 = arith.constant 0 : i32
    return %c0_i32, %c0_i32_0 : i32, i32
  }
  func.func @transform_7(%arg0: i32) -> (i32, i32) {
    %c0_i32 = arith.constant 0 : i32
    %c0_i32_0 = arith.constant 0 : i32
    return %c0_i32, %arg0 : i32, i32
  }
}

</mosaic_0001>

<llo_original>
// kernel: tpu_custom_call.1
$region0: #{tpu_custom_call.1}
  #allocation0 [shape = 'u32[]', space=smem, size = 0x4, offset = 0x4, fixed_abs, tag = 'smem constant byte address 0x4 - core index']
  #allocation1 [shape = 'u32[144,128]{1,0:T(1,128)}', space=vmem, size = 0x12000, scoped, tag = 'internal scratch']
  %s0 = inlined_call_operand.vmem [shape: f32[8,384], index: 0, kind: input, shape index: {}]
  %s1 = inlined_call_operand.vmem [shape: s32[1,384], index: 1, kind: input, shape index: {}]
  %s2 = inlined_call_operand.vmem [shape: f32[64,8], index: 2, kind: input, shape index: {}]
  %s3 = inlined_call_operand.vmem [shape: f32[64,64], index: 3, kind: input, shape index: {}]
  %s4 = inlined_call_operand.vmem [shape: f32[64,1], index: 4, kind: input, shape index: {}]
  %s5 = inlined_call_operand.vmem [shape: f32[8,64], index: 5, kind: input, shape index: {}]
  %s6 = inlined_call_operand.vmem [shape: f32[8,1], index: 6, kind: input, shape index: {}]
  %s7 = inlined_call_operand.hbm [shape: f32[1,384], index: 7, kind: output, shape index: {}]
  %s8 = sld [smem:[#allocation0]]
  $region61: #{tpu_custom_call.1} parent=0
    _
  %s10 = ssub.s32 1, %s8
  %s11 = scalar_select 0, %s10, %s8
  $region1: #{tpu_custom_call.1} parent=0
    #allocation2 [shape = 'u8[2048]{0}', space=vmem, size = 0x800, scoped, tag = 'output window, operand 0']
    #allocation3 [shape = 's32[2]{0}', space=sflag, size = 0x8, scoped, tag = 'scoped memory for tpu_custom_call.1']
    %12 = vsyncpa [#allocation3], 0
    %s13 = scalar_lea.sflag [#allocation3], 1
    %14 = vsyncpa %s13, 0
    loop: start=0, step=1, limit=4
    $region2: #{tpu_custom_call.1} parent=1 // loop_pre_header
      _
    $region3: #{tpu_custom_call.1} parent=1 // loop_header
      %s16 = sphi 0, %s20
      %p17 = scmp.ge.s32.totalorder %s16, 4
      %s26 = sphi 0, %s28
      %s29 = sphi 0, %s26
      %s30 = sphi 0, %s29
      %s46 = sphi 0, %s30
      %s52 = sphi 0, %s54
      %s55 = sphi 0, %s52
      %s56 = sphi 0, %s55
      %s72 = sphi 0, %s56
      %s76 = sphi 0, %s76
      %s78 = sphi 0, %s76
      %s79 = sphi 0, %s78
      %s93 = sphi 0, %s79
      %s97 = sphi 0, %s97
      %s99 = sphi 0, %s97
      %s100 = sphi 0, %s99
      %s114 = sphi 0, %s100
      %s118 = sphi 0, %s118
      %s120 = sphi 0, %s118
      %s121 = sphi 0, %s120
      %s135 = sphi 0, %s121
      %s139 = sphi 0, %s139
      %s141 = sphi 0, %s139
      %s142 = sphi 0, %s141
      %s156 = sphi 0, %s142
      %s160 = sphi 0, %s160
      %s162 = sphi 0, %s160
      %s163 = sphi 0, %s162
      %s177 = sphi 0, %s163
      %s183 = sphi 0, %s185
      %s186 = sphi 0, %s183
      %s187 = sphi 0, %s186
      %s203 = sphi 0, %s187
    $region4: #{tpu_custom_call.1} parent=1 // loop_header_branch
      %19 = sbr.rel (%p17) target = $region8
    $region5: #{tpu_custom_call.1} parent=1 // loop_body
      %s21 = ssub.s32 %s16, 1
      %s22 = ssub.s32 %s16, 2
      %s23 = sadd.s32 %s16, 1
      %s24 = ssub.s32 %s16, %s23
      %p25 = scmp.eq.s32.totalorder %s24, 0
      %s27 = sadd.s32 %s26, 1
      %s28 = scalar_select %p25, %s26, %s27
      %p31 = pneg %p25
      %p32 = scmp.eq.s32.totalorder %s16, 1
      %p33 = por %p31, %p32
      %p34 = scmp.ne.s32.totalorder %s26, %s29
      %p35 = scmp.eq.s32.totalorder %s16, 0
      %p36 = por %p34, %p35
      %p37 = scmp.ne.s32.totalorder %s26, %s29
      %p38 = scmp.eq.s32.totalorder %s21, 1
      %p39 = por %p37, %p38
      %p40 = scmp.ne.s32.totalorder %s29, %s30
      %p41 = scmp.eq.s32.totalorder %s21, 0
      %p42 = por %p40, %p41
      %p43 = scmp.ne.s32.totalorder %s29, %s30
      %p44 = scmp.eq.s32.totalorder %s22, 1
      %p45 = por %p43, %p44
      %p47 = scmp.ne.s32.totalorder %s30, %s46
      %p48 = scmp.eq.s32.totalorder %s22, 0
      %p49 = por %p47, %p48
      %s50 = ssub.s32 %s16, %s23
      %p51 = scmp.eq.s32.totalorder %s50, 0
      %s53 = sadd.s32 %s52, 1
      %s54 = scalar_select %p51, %s52, %s53
      %p57 = pneg %p51
      %p58 = scmp.eq.s32.totalorder %s16, 1
      %p59 = por %p57, %p58
      %p60 = scmp.ne.s32.totalorder %s52, %s55
      %p61 = scmp.eq.s32.totalorder %s16, 0
      %p62 = por %p60, %p61
      %p63 = scmp.ne.s32.totalorder %s52, %s55
      %p64 = scmp.eq.s32.totalorder %s21, 1
      %p65 = por %p63, %p64
      %p66 = scmp.ne.s32.totalorder %s55, %s56
      %p67 = scmp.eq.s32.totalorder %s21, 0
      %p68 = por %p66, %p67
      %p69 = scmp.ne.s32.totalorder %s55, %s56
      %p70 = scmp.eq.s32.totalorder %s22, 1
      %p71 = por %p69, %p70
      %p73 = scmp.ne.s32.totalorder %s56, %s72
      %p74 = scmp.eq.s32.totalorder %s22, 0
      %p75 = por %p73, %p74
      %s77 = sadd.s32 %s76, 1
      %p80 = scmp.eq.s32.totalorder %s16, 1
      %p81 = scmp.ne.s32.totalorder %s76, %s78
      %p82 = scmp.eq.s32.totalorder %s16, 0
      %p83 = por %p81, %p82
      %p84 = scmp.ne.s32.totalorder %s76, %s78
      %p85 = scmp.eq.s32.totalorder %s21, 1
      %p86 = por %p84, %p85
      %p87 = scmp.ne.s32.totalorder %s78, %s79
      %p88 = scmp.eq.s32.totalorder %s21, 0
      %p89 = por %p87, %p88
      %p90 = scmp.ne.s32.totalorder %s78, %s79
      %p91 = scmp.eq.s32.totalorder %s22, 1
      %p92 = por %p90, %p91
      %p94 = scmp.ne.s32.totalorder %s79, %s93
      %p95 = scmp.eq.s32.totalorder %s22, 0
      %p96 = por %p94, %p95
      %s98 = sadd.s32 %s97, 1
      %p101 = scmp.eq.s32.totalorder %s16, 1
      %p102 = scmp.ne.s32.totalorder %s97, %s99
      %p103 = scmp.eq.s32.totalorder %s16, 0
      %p104 = por %p102, %p103
      %p105 = scmp.ne.s32.totalorder %s97, %s99
      %p106 = scmp.eq.s32.totalorder %s21, 1
      %p107 = por %p105, %p106
      %p108 = scmp.ne.s32.totalorder %s99, %s100
      %p109 = scmp.eq.s32.totalorder %s21, 0
      %p110 = por %p108, %p109
      %p111 = scmp.ne.s32.totalorder %s99, %s100
      %p112 = scmp.eq.s32.totalorder %s22, 1
      %p113 = por %p111, %p112
      %p115 = scmp.ne.s32.totalorder %s100, %s114
      %p116 = scmp.eq.s32.totalorder %s22, 0
      %p117 = por %p115, %p116
      %s119 = sadd.s32 %s118, 1
      %p122 = scmp.eq.s32.totalorder %s16, 1
      %p123 = scmp.ne.s32.totalorder %s118, %s120
      %p124 = scmp.eq.s32.totalorder %s16, 0
      %p125 = por %p123, %p124
      %p126 = scmp.ne.s32.totalorder %s118, %s120
      %p127 = scmp.eq.s32.totalorder %s21, 1
      %p128 = por %p126, %p127
      %p129 = scmp.ne.s32.totalorder %s120, %s121
      %p130 = scmp.eq.s32.totalorder %s21, 0
      %p131 = por %p129, %p130
      %p132 = scmp.ne.s32.totalorder %s120, %s121
      %p133 = scmp.eq.s32.totalorder %s22, 1
      %p134 = por %p132, %p133
      %p136 = scmp.ne.s32.totalorder %s121, %s135
      %p137 = scmp.eq.s32.totalorder %s22, 0
      %p138 = por %p136, %p137
      %s140 = sadd.s32 %s139, 1
      %p143 = scmp.eq.s32.totalorder %s16, 1
      %p144 = scmp.ne.s32.totalorder %s139, %s141
      %p145 = scmp.eq.s32.totalorder %s16, 0
      %p146 = por %p144, %p145
      %p147 = scmp.ne.s32.totalorder %s139, %s141
      %p148 = scmp.eq.s32.totalorder %s21, 1
      %p149 = por %p147, %p148
      %p150 = scmp.ne.s32.totalorder %s141, %s142
      %p151 = scmp.eq.s32.totalorder %s21, 0
      %p152 = por %p150, %p151
      %p153 = scmp.ne.s32.totalorder %s141, %s142
      %p154 = scmp.eq.s32.totalorder %s22, 1
      %p155 = por %p153, %p154
      %p157 = scmp.ne.s32.totalorder %s142, %s156
      %p158 = scmp.eq.s32.totalorder %s22, 0
      %p159 = por %p157, %p158
      %s161 = sadd.s32 %s160, 1
      %p164 = scmp.eq.s32.totalorder %s16, 1
      %p165 = scmp.ne.s32.totalorder %s160, %s162
      %p166 = scmp.eq.s32.totalorder %s16, 0
      %p167 = por %p165, %p166
      %p168 = scmp.ne.s32.totalorder %s160, %s162
      %p169 = scmp.eq.s32.totalorder %s21, 1
      %p170 = por %p168, %p169
      %p171 = scmp.ne.s32.totalorder %s162, %s163
      %p172 = scmp.eq.s32.totalorder %s21, 0
      %p173 = por %p171, %p172
      %p174 = scmp.ne.s32.totalorder %s162, %s163
      %p175 = scmp.eq.s32.totalorder %s22, 1
      %p176 = por %p174, %p175
      %p178 = scmp.ne.s32.totalorder %s163, %s177
      %p179 = scmp.eq.s32.totalorder %s22, 0
      %p180 = por %p178, %p179
      %s181 = ssub.s32 %s16, %s23
      %p182 = scmp.eq.s32.totalorder %s181, 0
      %s184 = sadd.s32 %s183, 1
      %s185 = scalar_select %p182, %s183, %s184
      %p188 = pneg %p182
      %p189 = scmp.eq.s32.totalorder %s16, 1
      %p190 = por %p188, %p189
      %p191 = scmp.ne.s32.totalorder %s183, %s186
      %p192 = scmp.eq.s32.totalorder %s16, 0
      %p193 = por %p191, %p192
      %p194 = scmp.ne.s32.totalorder %s183, %s186
      %p195 = scmp.eq.s32.totalorder %s21, 1
      %p196 = por %p194, %p195
      %p197 = scmp.ne.s32.totalorder %s186, %s187
      %p198 = scmp.eq.s32.totalorder %s21, 0
      %p199 = por %p197, %p198
      %p200 = scmp.ne.s32.totalorder %s186, %s187
      %p201 = scmp.eq.s32.totalorder %s22, 1
      %p202 = por %p200, %p201
      %p204 = scmp.ne.s32.totalorder %s187, %s203
      %p205 = scmp.eq.s32.totalorder %s22, 0
      %p206 = por %p204, %p205
      %p207 = scmp.le.s32.totalorder 1, %s16
      %p208 = scmp.lt.s32.totalorder %s16, 3
      %p209 = pnand %p207, %p208
      %p210 = pneg %p209
      // Predicated region
      $region9: #{tpu_custom_call.1} parent=5 // pred_check
        _
      $region10: #{tpu_custom_call.1} parent=5 // pred_check_branch
        %212 = sbr.rel (%p209) target = $region12
      $region11: #{tpu_custom_call.1} parent=5 // pred_region
        %s213 = ssub.s32 %s16, 1
        // Predicated region
        $region13: #{tpu_custom_call.1} parent=11 // pred_check
          %p214 = pneg %p89
        $region14: #{tpu_custom_call.1} parent=11 // pred_check_branch
          %216 = sbr.rel (%p214) target = $region16
        $region15: #{tpu_custom_call.1} parent=11 // pred_region
          _
        $region16: #{tpu_custom_call.1} parent=11 // pred_fallthru
          _
        // Predicated region
        $region17: #{tpu_custom_call.1} parent=11 // pred_check
          %p217 = pneg %p110
        $region18: #{tpu_custom_call.1} parent=11 // pred_check_branch
          %219 = sbr.rel (%p217) target = $region20
        $region19: #{tpu_custom_call.1} parent=11 // pred_region
          _
        $region20: #{tpu_custom_call.1} parent=11 // pred_fallthru
          _
        // Predicated region
        $region21: #{tpu_custom_call.1} parent=11 // pred_check
          %p220 = pneg %p131
        $region22: #{tpu_custom_call.1} parent=11 // pred_check_branch
          %222 = sbr.rel (%p220) target = $region24
        $region23: #{tpu_custom_call.1} parent=11 // pred_region
          _
        $region24: #{tpu_custom_call.1} parent=11 // pred_fallthru
          _
        // Predicated region
        $region25: #{tpu_custom_call.1} parent=11 // pred_check
          %p223 = pneg %p152
        $region26: #{tpu_custom_call.1} parent=11 // pred_check_branch
          %225 = sbr.rel (%p223) target = $region28
        $region27: #{tpu_custom_call.1} parent=11 // pred_region
          _
        $region28: #{tpu_custom_call.1} parent=11 // pred_fallthru
          _
        // Predicated region
        $region29: #{tpu_custom_call.1} parent=11 // pred_check
          %p226 = pneg %p173
        $region30: #{tpu_custom_call.1} parent=11 // pred_check_branch
          %228 = sbr.rel (%p226) target = $region32
        $region31: #{tpu_custom_call.1} parent=11 // pred_region
          _
        $region32: #{tpu_custom_call.1} parent=11 // pred_fallthru
          _
      $region12: #{tpu_custom_call.1} parent=5 // pred_fallthru
        _
      %p229 = scmp.lt.s32.totalorder %s16, 2
      // Predicated region
      $region33: #{tpu_custom_call.1} parent=5 // pred_check
        %p230 = pneg %p229
      $region34: #{tpu_custom_call.1} parent=5 // pred_check_branch
        %232 = sbr.rel (%p230) target = $region36
      $region35: #{tpu_custom_call.1} parent=5 // pred_region
        // Predicated region
        $region37: #{tpu_custom_call.1} parent=35 // pred_check
          %p233 = pneg %p36
        $region38: #{tpu_custom_call.1} parent=35 // pred_check_branch
          %235 = sbr.rel (%p233) target = $region40
        $region39: #{tpu_custom_call.1} parent=35 // pred_region
          %s236 = smul.u32 2, %s16
          %s237 = ssub.s32 3, %s236
          %p238 = scmp.lt.s32.totalorder %s237, 2
          %s239 = scalar_select %p238, %s237, 2
          %s240 = smul.u32 128, %s239
          %p241 = scmp.lt.s32.totalorder %s236, 2
          %s242 = scalar_select %p241, %s236, 2
          %s243 = smul.addr %s242, 8
          %s244 = scalar_lea.vmem %s0, %s243
          %s245 = smul.u32 2, %s16
          %s246 = ssub.s32 3, %s245
          %p247 = scmp.lt.s32.totalorder %s246, 2
          %s248 = scalar_select %p247, %s246, 2
          %s249 = smul.u32 128, %s248
        $region40: #{tpu_custom_call.1} parent=35 // pred_fallthru
          _
        // Predicated region
        $region41: #{tpu_custom_call.1} parent=35 // pred_check
          %p250 = pneg %p62
        $region42: #{tpu_custom_call.1} parent=35 // pred_check_branch
          %252 = sbr.rel (%p250) target = $region44
        $region43: #{tpu_custom_call.1} parent=35 // pred_region
          %s253 = smul.u32 2, %s16
          %s254 = ssub.s32 3, %s253
          %p255 = scmp.lt.s32.totalorder %s254, 2
          %s256 = scalar_select %p255, %s254, 2
          %s257 = smul.u32 16, %s256
          %p258 = scmp.lt.s32.totalorder %s253, 2
          %s259 = scalar_select %p258, %s253, 2
          %s260 = scalar_lea.vmem %s1, %s259
          %s261 = smul.u32 2, %s16
          %s262 = ssub.s32 3, %s261
          %p263 = scmp.lt.s32.totalorder %s262, 2
          %s264 = scalar_select %p263, %s262, 2
          %s265 = smul.u32 16, %s264
        $region44: #{tpu_custom_call.1} parent=35 // pred_fallthru
          _
      $region36: #{tpu_custom_call.1} parent=5 // pred_fallthru
        _
      %p266 = scmp.le.s32.totalorder 1, %s16
      %p267 = scmp.lt.s32.totalorder %s16, 3
      %p268 = pnand %p266, %p267
      %p269 = pneg %p268
      // Predicated region
      $region45: #{tpu_custom_call.1} parent=5 // pred_check
        _
      $region46: #{tpu_custom_call.1} parent=5 // pred_check_branch
        %271 = sbr.rel (%p268) target = $region48
      $region47: #{tpu_custom_call.1} parent=5 // pred_region
        %s272 = ssub.s32 %s16, 1
        %s273 = smul.u32 2, %s21
        %s274 = ssub.s32 3, %s273
        %p275 = scmp.lt.s32.totalorder %s274, 2
        %s276 = scalar_select %p275, %s274, 2
        %s277 = smul.u32 128, %s276
        %p278 = scmp.lt.s32.totalorder %s273, 2
        %s279 = scalar_select %p278, %s273, 2
        %s280 = smul.addr %s279, 8
        %s281 = scalar_lea.vmem %s0, %s280
        %p282 = pneg %p42
        %p283 = pneg %p39
        %s284 = smul.u32 2, %s21
        %s285 = ssub.s32 3, %s284
        %p286 = scmp.lt.s32.totalorder %s285, 2
        %s287 = scalar_select %p286, %s285, 2
        %s288 = smul.u32 16, %s287
        %p289 = scmp.lt.s32.totalorder %s284, 2
        %s290 = scalar_select %p289, %s284, 2
        %s291 = scalar_lea.vmem %s1, %s290
        %p292 = pneg %p68
        %p293 = pneg %p65
        %p294 = pneg %p89
        %p295 = pneg %p86
        %p296 = pneg %p110
        %p297 = pneg %p107
        %p298 = pneg %p131
        %p299 = pneg %p128
        %p300 = pneg %p152
        %p301 = pneg %p149
        %p302 = pneg %p173
        %p303 = pneg %p170
        %p304 = pneg %p199
        %p305 = pneg %p196
        %s306 = sand.u32 %s186, 1
        %s307 = scalar_lea.sflag [#allocation3], %s306
        %s308 = sand.u32 %s186, 1
        %s309 = smul.addr %s308, 2
        %s310 = scalar_lea.vmem [#allocation2], %s309
        %s311 = smul.u32 2, %s21
        %s312 = ssub.s32 3, %s311
        %p313 = scmp.lt.s32.totalorder %s312, 2
        %s314 = scalar_select %p313, %s312, 2
        %s315 = smul.u32 128, %s314
        %p316 = scmp.lt.s32.totalorder %s311, 2
        %s317 = scalar_select %p316, %s311, 2
        %s318 = smul.addr %s317, 8
        %s319 = scalar_lea.vmem %s0, %s318
        %s320 = smul.u32 2, %s21
        %s321 = ssub.s32 3, %s320
        %p322 = scmp.lt.s32.totalorder %s321, 2
        %s323 = scalar_select %p322, %s321, 2
        %s324 = smul.u32 128, %s323
        %s325 = smul.u32 2, %s21
        %s326 = ssub.s32 3, %s325
        %p327 = scmp.lt.s32.totalorder %s326, 2
        %s328 = scalar_select %p327, %s326, 2
        %s329 = smul.u32 16, %s328
        %p330 = scmp.lt.s32.totalorder %s325, 2
        %s331 = scalar_select %p330, %s325, 2
        %s332 = scalar_lea.vmem %s1, %s331
        %s333 = smul.u32 2, %s21
        %s334 = ssub.s32 3, %s333
        %p335 = scmp.lt.s32.totalorder %s334, 2
        %s336 = scalar_select %p335, %s334, 2
        %s337 = smul.u32 16, %s336
        %s338 = smul.u32 2, %s21
        %s339 = ssub.s32 3, %s338
        %p340 = scmp.lt.s32.totalorder %s339, 2
        %s341 = scalar_select %p340, %s339, 2
        %s342 = smul.u32 16, %s341
        %v343 = vld [vmem:[%s2] sm:$0xff]
        %v344 = vld [vmem:[%s2 + $0x8] sm:$0xff]
        %v345 = vld [vmem:[%s2 + $0x10] sm:$0xff]
        %v346 = vld [vmem:[%s2 + $0x18] sm:$0xff]
        %v347 = vld [vmem:[%s2 + $0x20] sm:$0xff]
        %v348 = vld [vmem:[%s2 + $0x28] sm:$0xff]
        %v349 = vld [vmem:[%s2 + $0x30] sm:$0xff]
        %v350 = vld [vmem:[%s2 + $0x38] sm:$0xff]
        %v351 = vld [vmem:[%s319] sm:$0xff]
        %v352 = vld [vmem:[%s319 + $0x8] sm:$0xff]
        %vm353 = vcmask 64512
        %v355 = vsel %vm353, %v343, 0
        %v358 = vsel %vm353, %v344, 0
        %v361 = vsel %vm353, %v345, 0
        %v364 = vsel %vm353, %v346, 0
        %v367 = vsel %vm353, %v347, 0
        %v370 = vsel %vm353, %v348, 0
        %v373 = vsel %vm353, %v349, 0
        %v376 = vsel %vm353, %v350, 0
        %378 = vmatprep.subr.mxu0 %v352
        %379 = vmatpush1.msra.mxu0 %v351
        %380 = vmatprep.subr.mxu0 0.0
        %381 = vmatpush1.msra.mxu0 0.0
        %382 = vmatprep.subr.mxu0 0.0
        %383 = vmatpush1.msra.mxu0 0.0
        %384 = vmatprep.subr.mxu0 0.0
        %385 = vmatpush1.msra.mxu0 0.0
        %386 = vmatprep.subr.mxu0 0.0
        %387 = vmatpush1.msra.mxu0 0.0
        %388 = vmatprep.subr.mxu0 0.0
        %389 = vmatpush1.msra.mxu0 0.0
        %390 = vmatprep.subr.mxu0 0.0
        %391 = vmatpush1.msra.mxu0 0.0
        %392 = vmatprep.subr.mxu0 0.0
        %393 = vmatpush1.msra.mxu0 0.0
        %394 = vmatprep.subr.mxu0 0.0
        %395 = vmatpush1.msra.mxu0 0.0
        %396 = vmatprep.subr.mxu0 0.0
        %397 = vmatpush1.msra.mxu0 0.0
        %398 = vmatprep.subr.mxu0 0.0
        %399 = vmatpush1.msra.mxu0 0.0
        %400 = vmatprep.subr.mxu0 0.0
        %401 = vmatpush1.msra.mxu0 0.0
        %402 = vmatprep.subr.mxu0 0.0
        %403 = vmatpush1.msra.mxu0 0.0
        %404 = vmatprep.subr.mxu0 0.0
        %405 = vmatpush1.msra.mxu0 0.0
        %406 = vmatprep.subr.mxu0 0.0
        %407 = vmatpush1.msra.mxu0 0.0
        %408 = vmatprep.subr.mxu0 0.0
        %409 = vmatpush1.msra.mxu0 0.0
        %410 = vmatprep.subr.mxu0 0.0
        %411 = vmatpush1.msra.mxu0 0.0
        %412 = vmatprep.subr.mxu0 0.0
        %413 = vmatpush1.msra.mxu0 0.0
        %414 = vmatprep.subr.mxu0 0.0
        %415 = vmatpush1.msra.mxu0 0.0
        %416 = vmatprep.subr.mxu0 0.0
        %417 = vmatpush1.msra.mxu0 0.0
        %418 = vmatprep.subr.mxu0 0.0
        %419 = vmatpush1.msra.mxu0 0.0
        %420 = vmatprep.subr.mxu0 0.0
        %421 = vmatpush1.msra.mxu0 0.0
        %422 = vmatprep.subr.mxu0 0.0
        %423 = vmatpush1.msra.mxu0 0.0
        %424 = vmatprep.subr.mxu0 0.0
        %425 = vmatpush1.msra.mxu0 0.0
        %426 = vmatprep.subr.mxu0 0.0
        %427 = vmatpush1.msra.mxu0 0.0
        %428 = vmatprep.subr.mxu0 0.0
        %429 = vmatpush1.msra.mxu0 0.0
        %430 = vmatprep.subr.mxu0 0.0
        %431 = vmatpush1.msra.mxu0 0.0
        %432 = vmatprep.subr.mxu0 0.0
        %433 = vmatpush1.msra.mxu0 0.0
        %434 = vmatprep.subr.mxu0 0.0
        %435 = vmatpush1.msra.mxu0 0.0
        %436 = vmatprep.subr.mxu0 0.0
        %437 = vmatpush1.msra.mxu0 0.0
        %438 = vmatprep.subr.mxu0 0.0
        %439 = vmatpush1.msra.mxu0 0.0
        %440 = vmatprep.subr.mxu0 0.0
        %441 = vmatpush1.msra.mxu0 0.0
        %442 = vmatprep.mubr.f32.mxu0 0.0
        %443 = vmatmul.mubr.f32.gmra.mrb[0].mxu0 %v355
        %v444 = vpop.f32.mrb[0].mxu0
        %v445 = vadd.f32 0.0, %v444
        %v446 = vpop.f32.mrb[0].mxu0
        %v447 = vadd.f32 0.0, %v446
        %448 = vmatprep.mubr.f32.mxu0 0.0
        %449 = vmatmul.mubr.f32.gmra.mrb[0].mxu0 %v358
        %v450 = vpop.f32.mrb[0].mxu0
        %v451 = vadd.f32 0.0, %v450
        %v452 = vpop.f32.mrb[0].mxu0
        %v453 = vadd.f32 0.0, %v452
        %454 = vmatprep.mubr.f32.mxu0 0.0
        %455 = vmatmul.mubr.f32.gmra.mrb[0].mxu0 %v361
        %v456 = vpop.f32.mrb[0].mxu0
        %v457 = vadd.f32 0.0, %v456
        %v458 = vpop.f32.mrb[0].mxu0
        %v459 = vadd.f32 0.0, %v458
        %460 = vmatprep.mubr.f32.mxu0 0.0
        %461 = vmatmul.mubr.f32.gmra.mrb[0].mxu0 %v364
        %v462 = vpop.f32.mrb[0].mxu0
        %v463 = vadd.f32 0.0, %v462
        %v464 = vpop.f32.mrb[0].mxu0
        %v465 = vadd.f32 0.0, %v464
        %466 = vmatprep.mubr.f32.mxu0 0.0
        %467 = vmatmul.mubr.f32.gmra.mrb[0].mxu0 %v367
        %v468 = vpop.f32.mrb[0].mxu0
        %v469 = vadd.f32 0.0, %v468
        %v470 = vpop.f32.mrb[0].mxu0
        %v471 = vadd.f32 0.0, %v470
        %472 = vmatprep.mubr.f32.mxu0 0.0
        %473 = vmatmul.mubr.f32.gmra.mrb[0].mxu0 %v370
        %v474 = vpop.f32.mrb[0].mxu0
        %v475 = vadd.f32 0.0, %v474
        %v476 = vpop.f32.mrb[0].mxu0
        %v477 = vadd.f32 0.0, %v476
        %478 = vmatprep.mubr.f32.mxu0 0.0
        %479 = vmatmul.mubr.f32.gmra.mrb[0].mxu0 %v373
        %v480 = vpop.f32.mrb[0].mxu0
        %v481 = vadd.f32 0.0, %v480
        %v482 = vpop.f32.mrb[0].mxu0
        %v483 = vadd.f32 0.0, %v482
        %484 = vmatprep.mubr.f32.mxu0 0.0
        %485 = vmatmul.mubr.f32.gmra.mrb[0].mxu0 %v376
        %v486 = vpop.f32.mrb[0].mxu0
        %v487 = vadd.f32 0.0, %v486
        %v488 = vpop.f32.mrb[0].mxu0
        %v489 = vadd.f32 0.0, %v488
        %490 = vdwg.mxu0
        %v491 = vtanh.pop %v445
        %v492 = vtanh.pop %v447
        %v493 = vtanh.pop %v451
        %v494 = vtanh.pop %v453
        %v495 = vtanh.pop %v457
        %v496 = vtanh.pop %v459
        %v497 = vtanh.pop %v463
        %v498 = vtanh.pop %v465
        %v499 = vtanh.pop %v469
        %v500 = vtanh.pop %v471
        %v501 = vtanh.pop %v475
        %v502 = vtanh.pop %v477
        %v503 = vtanh.pop %v481
        %v504 = vtanh.pop %v483
        %v505 = vtanh.pop %v487
        %v506 = vtanh.pop %v489
        %v507 = vld [vmem:[%s3] sm:$0xff]
        %v508 = vld [vmem:[%s3 + $0x8] sm:$0xff]
        %v509 = vld [vmem:[%s3 + $0x10] sm:$0xff]
        %v510 = vld [vmem:[%s3 + $0x18] sm:$0xff]
        %v511 = vld [vmem:[%s3 + $0x20] sm:$0xff]
        %v512 = vld [vmem:[%s3 + $0x28] sm:$0xff]
        %v513 = vld [vmem:[%s3 + $0x30] sm:$0xff]
        %v514 = vld [vmem:[%s3 + $0x38] sm:$0xff]
        %v515 = vld [vmem:[%s4] sm:$0xff]
        %v516 = vld [vmem:[%s4 + $0x8] sm:$0xff]
        %v517 = vld [vmem:[%s4 + $0x10] sm:$0xff]
        %v518 = vld [vmem:[%s4 + $0x18] sm:$0xff]
        %v519 = vld [vmem:[%s4 + $0x20] sm:$0xff]
        %v520 = vld [vmem:[%s4 + $0x28] sm:$0xff]
        %v521 = vld [vmem:[%s4 + $0x30] sm:$0xff]
        %v522 = vld [vmem:[%s4 + $0x38] sm:$0xff]
        %524 = vset.pattern.permute.xlu0 0
        %525 = vperm.xlu0 %524, %v515
        %v526 = vpop.permute.xlu0 %525
        %529 = vset.pattern.permute.xlu0 0
        %530 = vperm.xlu0 %529, %v516
        %v531 = vpop.permute.xlu0 %530
        %534 = vset.pattern.permute.xlu0 0
        %535 = vperm.xlu0 %534, %v517
        %v536 = vpop.permute.xlu0 %535
        %539 = vset.pattern.permute.xlu0 0
        %540 = vperm.xlu0 %539, %v518
        %v541 = vpop.permute.xlu0 %540
        %544 = vset.pattern.permute.xlu0 0
        %545 = vperm.xlu0 %544, %v519
        %v546 = vpop.permute.xlu0 %545
        %549 = vset.pattern.permute.xlu0 0
        %550 = vperm.xlu0 %549, %v520
        %v551 = vpop.permute.xlu0 %550
        %554 = vset.pattern.permute.xlu0 0
        %555 = vperm.xlu0 %554, %v521
        %v556 = vpop.permute.xlu0 %555
        %559 = vset.pattern.permute.xlu0 0
        %560 = vperm.xlu0 %559, %v522
        %v561 = vpop.permute.xlu0 %560
        %vm563 = vcmask 523264
        %v565 = vsel %vm563, %v507, 0
        %v568 = vsel %vm563, %v508, 0
        %v571 = vsel %vm563, %v509, 0
        %v574 = vsel %vm563, %v510, 0
        %v577 = vsel %vm563, %v511, 0
        %v580 = vsel %vm563, %v512, 0
        %v583 = vsel %vm563, %v513, 0
        %v586 = vsel %vm563, %v514, 0
        %588 = vmatprep.subr.mxu0 %v492
        %589 = vmatpush1.msra.mxu0 %v491
        %590 = vmatprep.subr.mxu0 %v494
        %591 = vmatpush1.msra.mxu0 %v493
        %592 = vmatprep.subr.mxu0 %v496
        %593 = vmatpush1.msra.mxu0 %v495
        %594 = vmatprep.subr.mxu0 %v498
        %595 = vmatpush1.msra.mxu0 %v497
        %596 = vmatprep.subr.mxu0 %v500
        %597 = vmatpush1.msra.mxu0 %v499
        %598 = vmatprep.subr.mxu0 %v502
        %599 = vmatpush1.msra.mxu0 %v501
        %600 = vmatprep.subr.mxu0 %v504
        %601 = vmatpush1.msra.mxu0 %v503
        %602 = vmatprep.subr.mxu0 %v506
        %603 = vmatpush1.msra.mxu0 %v505
        %604 = vmatprep.subr.mxu0 0.0
        %605 = vmatpush1.msra.mxu0 0.0
        %606 = vmatprep.subr.mxu0 0.0
        %607 = vmatpush1.msra.mxu0 0.0
        %608 = vmatprep.subr.mxu0 0.0
        %609 = vmatpush1.msra.mxu0 0.0
        %610 = vmatprep.subr.mxu0 0.0
        %611 = vmatpush1.msra.mxu0 0.0
        %612 = vmatprep.subr.mxu0 0.0
        %613 = vmatpush1.msra.mxu0 0.0
        %614 = vmatprep.subr.mxu0 0.0
        %615 = vmatpush1.msra.mxu0 0.0
        %616 = vmatprep.subr.mxu0 0.0
        %617 = vmatpush1.msra.mxu0 0.0
        %618 = vmatprep.subr.mxu0 0.0
        %619 = vmatpush1.msra.mxu0 0.0
        %620 = vmatprep.subr.mxu0 0.0
        %621 = vmatpush1.msra.mxu0 0.0
        %622 = vmatprep.subr.mxu0 0.0
        %623 = vmatpush1.msra.mxu0 0.0
        %624 = vmatprep.subr.mxu0 0.0
        %625 = vmatpush1.msra.mxu0 0.0
        %626 = vmatprep.subr.mxu0 0.0
        %627 = vmatpush1.msra.mxu0 0.0
        %628 = vmatprep.subr.mxu0 0.0
        %629 = vmatpush1.msra.mxu0 0.0
        %630 = vmatprep.subr.mxu0 0.0
        %631 = vmatpush1.msra.mxu0 0.0
        %632 = vmatprep.subr.mxu0 0.0
        %633 = vmatpush1.msra.mxu0 0.0
        %634 = vmatprep.subr.mxu0 0.0
        %635 = vmatpush1.msra.mxu0 0.0
        %636 = vmatprep.subr.mxu0 0.0
        %637 = vmatpush1.msra.mxu0 0.0
        %638 = vmatprep.subr.mxu0 0.0
        %639 = vmatpush1.msra.mxu0 0.0
        %640 = vmatprep.subr.mxu0 0.0
        %641 = vmatpush1.msra.mxu0 0.0
        %642 = vmatprep.subr.mxu0 0.0
        %643 = vmatpush1.msra.mxu0 0.0
        %644 = vmatprep.subr.mxu0 0.0
        %645 = vmatpush1.msra.mxu0 0.0
        %646 = vmatprep.subr.mxu0 0.0
        %647 = vmatpush1.msra.mxu0 0.0
        %648 = vmatprep.subr.mxu0 0.0
        %649 = vmatpush1.msra.mxu0 0.0
        %650 = vmatprep.subr.mxu0 0.0
        %651 = vmatpush1.msra.mxu0 0.0
        %652 = vmatprep.mubr.f32.mxu0 0.0
        %653 = vmatmul.mubr.f32.gmra.mrb[0].mxu0 %v565
        %v654 = vpop.f32.mrb[0].mxu0
        %v655 = vadd.f32 %v526, %v654
        %v656 = vpop.f32.mrb[0].mxu0
        %v657 = vadd.f32 %v526, %v656
        %658 = vmatprep.mubr.f32.mxu0 0.0
        %659 = vmatmul.mubr.f32.gmra.mrb[0].mxu0 %v568
        %v660 = vpop.f32.mrb[0].mxu0
        %v661 = vadd.f32 %v531, %v660
        %v662 = vpop.f32.mrb[0].mxu0
        %v663 = vadd.f32 %v531, %v662
        %664 = vmatprep.mubr.f32.mxu0 0.0
        %665 = vmatmul.mubr.f32.gmra.mrb[0].mxu0 %v571
        %v666 = vpop.f32.mrb[0].mxu0
        %v667 = vadd.f32 %v536, %v666
        %v668 = vpop.f32.mrb[0].mxu0
        %v669 = vadd.f32 %v536, %v668
        %670 = vmatprep.mubr.f32.mxu0 0.0
        %671 = vmatmul.mubr.f32.gmra.mrb[0].mxu0 %v574
        %v672 = vpop.f32.mrb[0].mxu0
        %v673 = vadd.f32 %v541, %v672
        %v674 = vpop.f32.mrb[0].mxu0
        %v675 = vadd.f32 %v541, %v674
        %676 = vmatprep.mubr.f32.mxu0 0.0
        %677 = vmatmul.mubr.f32.gmra.mrb[0].mxu0 %v577
        %v678 = vpop.f32.mrb[0].mxu0
        %v679 = vadd.f32 %v546, %v678
        %v680 = vpop.f32.mrb[0].mxu0
        %v681 = vadd.f32 %v546, %v680
        %682 = vmatprep.mubr.f32.mxu0 0.0
        %683 = vmatmul.mubr.f32.gmra.mrb[0].mxu0 %v580
        %v684 = vpop.f32.mrb[0].mxu0
        %v685 = vadd.f32 %v551, %v684
        %v686 = vpop.f32.mrb[0].mxu0
        %v687 = vadd.f32 %v551, %v686
        %688 = vmatprep.mubr.f32.mxu0 0.0
        %689 = vmatmul.mubr.f32.gmra.mrb[0].mxu0 %v583
        %v690 = vpop.f32.mrb[0].mxu0
        %v691 = vadd.f32 %v556, %v690
        %v692 = vpop.f32.mrb[0].mxu0
        %v693 = vadd.f32 %v556, %v692
        %694 = vmatprep.mubr.f32.mxu0 0.0
        %695 = vmatmul.mubr.f32.gmra.mrb[0].mxu0 %v586
        %v696 = vpop.f32.mrb[0].mxu0
        %v697 = vadd.f32 %v561, %v696
        %v698 = vpop.f32.mrb[0].mxu0
        %v699 = vadd.f32 %v561, %v698
        %700 = vdwg.mxu0
        %v701 = vtanh.pop %v655
        %v702 = vtanh.pop %v657
        %v703 = vtanh.pop %v661
        %v704 = vtanh.pop %v663
        %v705 = vtanh.pop %v667
        %v706 = vtanh.pop %v669
        %v707 = vtanh.pop %v673
        %v708 = vtanh.pop %v675
        %v709 = vtanh.pop %v679
        %v710 = vtanh.pop %v681
        %v711 = vtanh.pop %v685
        %v712 = vtanh.pop %v687
        %v713 = vtanh.pop %v691
        %v714 = vtanh.pop %v693
        %v715 = vtanh.pop %v697
        %v716 = vtanh.pop %v699
        %v717 = vld [vmem:[%s5] sm:$0xff]
        %v718 = vld [vmem:[%s6] sm:$0xff]
        %720 = vset.pattern.permute.xlu0 0
        %721 = vperm.xlu0 %720, %v718
        %v722 = vpop.permute.xlu0 %721
        %v725 = vsel %vm563, %v717, 0
        %727 = vmatprep.subr.mxu0 %v702
        %728 = vmatpush1.msra.mxu0 %v701
        %729 = vmatprep.subr.mxu0 %v704
        %730 = vmatpush1.msra.mxu0 %v703
        %731 = vmatprep.subr.mxu0 %v706
        %732 = vmatpush1.msra.mxu0 %v705
        %733 = vmatprep.subr.mxu0 %v708
        %734 = vmatpush1.msra.mxu0 %v707
        %735 = vmatprep.subr.mxu0 %v710
        %736 = vmatpush1.msra.mxu0 %v709
        %737 = vmatprep.subr.mxu0 %v712
        %738 = vmatpush1.msra.mxu0 %v711
        %739 = vmatprep.subr.mxu0 %v714
        %740 = vmatpush1.msra.mxu0 %v713
        %741 = vmatprep.subr.mxu0 %v716
        %742 = vmatpush1.msra.mxu0 %v715
        %743 = vmatprep.subr.mxu0 0.0
        %744 = vmatpush1.msra.mxu0 0.0
        %745 = vmatprep.subr.mxu0 0.0
        %746 = vmatpush1.msra.mxu0 0.0
        %747 = vmatprep.subr.mxu0 0.0
        %748 = vmatpush1.msra.mxu0 0.0
        %749 = vmatprep.subr.mxu0 0.0
        %750 = vmatpush1.msra.mxu0 0.0
        %751 = vmatprep.subr.mxu0 0.0
        %752 = vmatpush1.msra.mxu0 0.0
        %753 = vmatprep.subr.mxu0 0.0
        %754 = vmatpush1.msra.mxu0 0.0
        %755 = vmatprep.subr.mxu0 0.0
        %756 = vmatpush1.msra.mxu0 0.0
        %757 = vmatprep.subr.mxu0 0.0
        %758 = vmatpush1.msra.mxu0 0.0
        %759 = vmatprep.subr.mxu0 0.0
        %760 = vmatpush1.msra.mxu0 0.0
        %761 = vmatprep.subr.mxu0 0.0
        %762 = vmatpush1.msra.mxu0 0.0
        %763 = vmatprep.subr.mxu0 0.0
        %764 = vmatpush1.msra.mxu0 0.0
        %765 = vmatprep.subr.mxu0 0.0
        %766 = vmatpush1.msra.mxu0 0.0
        %767 = vmatprep.subr.mxu0 0.0
        %768 = vmatpush1.msra.mxu0 0.0
        %769 = vmatprep.subr.mxu0 0.0
        %770 = vmatpush1.msra.mxu0 0.0
        %771 = vmatprep.subr.mxu0 0.0
        %772 = vmatpush1.msra.mxu0 0.0
        %773 = vmatprep.subr.mxu0 0.0
        %774 = vmatpush1.msra.mxu0 0.0
        %775 = vmatprep.subr.mxu0 0.0
        %776 = vmatpush1.msra.mxu0 0.0
        %777 = vmatprep.subr.mxu0 0.0
        %778 = vmatpush1.msra.mxu0 0.0
        %779 = vmatprep.subr.mxu0 0.0
        %780 = vmatpush1.msra.mxu0 0.0
        %781 = vmatprep.subr.mxu0 0.0
        %782 = vmatpush1.msra.mxu0 0.0
        %783 = vmatprep.subr.mxu0 0.0
        %784 = vmatpush1.msra.mxu0 0.0
        %785 = vmatprep.subr.mxu0 0.0
        %786 = vmatpush1.msra.mxu0 0.0
        %787 = vmatprep.subr.mxu0 0.0
        %788 = vmatpush1.msra.mxu0 0.0
        %789 = vmatprep.subr.mxu0 0.0
        %790 = vmatpush1.msra.mxu0 0.0
        %791 = vmatprep.mubr.f32.mxu0 0.0
        %792 = vmatmul.mubr.f32.gmra.mrb[0].mxu0 %v725
        %v793 = vpop.f32.mrb[0].mxu0
        %v794 = vadd.f32 %v722, %v793
        %v795 = vpop.f32.mrb[0].mxu0
        %v796 = vadd.f32 %v722, %v795
        %797 = vdwg.mxu0
        %v800 = vrot.slane %v794, 1
        %v801 = vrot.slane %v796, 1
        %v804 = vmax.f32 %v794, %v800
        %v805 = vmax.f32 %v796, %v801
        %v806 = vrot.slane %v794, 2
        %v807 = vrot.slane %v796, 2
        %v810 = vmax.f32 %v804, %v806
        %v811 = vmax.f32 %v805, %v807
        %v812 = vsub.f32 %v794, %v810
        %v813 = vsub.f32 %v796, %v811
        %v814 = vmul.f32 %v812, 1.442695
        %v815 = vpow.pop %v814
        %v816 = vmul.f32 %v813, 1.442695
        %v817 = vpow.pop %v816
        %v820 = vrot.slane %v810, 7
        %v821 = vrot.slane %v811, 7
        %v824 = vsub.f32 %v794, %v820
        %v825 = vsub.f32 %v796, %v821
        %v826 = vmul.f32 %v824, 1.442695
        %v827 = vpow.pop %v826
        %v828 = vmul.f32 %v825, 1.442695
        %v829 = vpow.pop %v828
        %v832 = vrot.slane %v827, 1
        %v833 = vrot.slane %v829, 1
        %v836 = vadd.f32 %v815, %v832
        %v837 = vadd.f32 %v817, %v833
        %v838 = vrot.slane %v810, 6
        %v839 = vrot.slane %v811, 6
        %v842 = vsub.f32 %v794, %v838
        %v843 = vsub.f32 %v796, %v839
        %v844 = vmul.f32 %v842, 1.442695
        %v845 = vpow.pop %v844
        %v846 = vmul.f32 %v843, 1.442695
        %v847 = vpow.pop %v846
        %v850 = vrot.slane %v845, 2
        %v851 = vrot.slane %v847, 2
        %v854 = vadd.f32 %v836, %v850
        %v855 = vadd.f32 %v837, %v851
        %v856 = vlog2.pop %v854
        %v857 = vmul.f32 %v856, 0.6931472
        %v858 = vlog2.pop %v855
        %v859 = vmul.f32 %v858, 0.6931472
        %v860 = vadd.f32 %v810, %v857
        %v861 = vadd.f32 %v811, %v859
        %v862 = vld [vmem:[%s332] sm:$0x3]
        %vm863 = vcmp.eq.s32.totalorder %v862, 1
        %v864 = vcombine.low %v794, %v796
        %v866 = vunpack.c.l.s4 1966171168
        %v867 = vunpack.c.0.s8 %v866
        %v868 = vlaneseq
        %v869 = vshrl.u32 %v868, 7
        %v870 = vsub.s32 %v867, %v869
        %v871 = vrot.slane %v864, %v870
        %v872 = vcombine.high %v871, %v871
        %v874 = vunpack.c.l.s4 1966171168
        %v875 = vunpack.c.0.s8 %v874
        %v876 = vlaneseq
        %v877 = vshrl.u32 %v876, 7
        %v878 = vsub.s32 %v875, %v877
        %v879 = vrot.slane %v872, %v878
        %v882 = vunpack.c.l.s4 1966171168
        %v883 = vunpack.c.0.s8 %v882
        %v884 = vlaneseq
        %v885 = vshrl.u32 %v884, 7
        %v886 = vsub.s32 %v883, %v885
        %v887 = vrot.slane %v871, %v886
        %v888 = vcombine.high %v887, %v887
        %v890 = vsel %vm863, %v879, %v888
        %vm891 = vcmp.eq.s32.totalorder %v862, 0
        %v893 = vsel %vm891, %v887, %v890
        %v896 = vcombine.low %v860, %v861
        %v898 = vunpack.c.l.s4 1966171168
        %v899 = vunpack.c.0.s8 %v898
        %v900 = vlaneseq
        %v901 = vshrl.u32 %v900, 7
        %v902 = vsub.s32 %v899, %v901
        %v903 = vrot.slane %v896, %v902
        %v905 = vunpack.c.l.s4 1966171168
        %v906 = vunpack.c.0.s8 %v905
        %v907 = vlaneseq
        %v908 = vshrl.u32 %v907, 7
        %v909 = vsub.s32 %v906, %v908
        %v910 = vrot.slane %v903, %v909
        %v912 = vsub.f32 %v893, %v910
        %v913 = vlaneseq
        %vm914 = vcmp.ge.s32.totalorder %v913, 0
        %vm915 = vcmp.lt.s32.totalorder %v913, 256
        %vm916 = vmand %vm914, %vm915
        %917 = vst.msk [vmem:[%s310] sm:$0x3] %vm916, %v912
        %s918 = sand.u32 %s186, 1
        %s919 = scalar_lea.sflag [#allocation3], %s918
        %s920 = sand.u32 %s186, 1
        %s921 = smul.addr %s920, 2
        %s922 = scalar_lea.vmem [#allocation2], %s921
        // Predicated region
        $region49: #{tpu_custom_call.1} parent=47 // pred_check
          %p923 = pneg %p196
        $region50: #{tpu_custom_call.1} parent=47 // pred_check_branch
          %925 = sbr.rel (%p923) target = $region52
        $region51: #{tpu_custom_call.1} parent=47 // pred_region
          %s926 = smul.u32 2, %s21
          %s927 = ssub.s32 3, %s926
          %p928 = scmp.lt.s32.totalorder %s927, 2
          %s929 = scalar_select %p928, %s927, 2
          %s930 = smul.u32 16, %s929
          %s932 = ssub.s32 32, %s930
          %933 = vsyncadd %s919, %s932
          %p934 = scmp.ne.s32.totalorder 0, %s930
          %s935 = smul.addr %s926, 16
          %s936 = scalar_lea.hbm %s7, %s935
          %s937 = sshll.u32 %s929, 4
          %s938 = sshll.u32 %s922, 4
          %s939 = int_to_ptr.vmem [resolvable:$true] %s938
          %941 = dma.vmem_to_hbm [thread:$0]  (%p934), %s939, %s937, %s936, %s919
        $region52: #{tpu_custom_call.1} parent=47 // pred_fallthru
          _
      $region48: #{tpu_custom_call.1} parent=5 // pred_fallthru
        _
      %p942 = scmp.le.s32.totalorder 2, %s16
      // Predicated region
      $region53: #{tpu_custom_call.1} parent=5 // pred_check
        %p943 = pneg %p942
      $region54: #{tpu_custom_call.1} parent=5 // pred_check_branch
        %945 = sbr.rel (%p943) target = $region56
      $region55: #{tpu_custom_call.1} parent=5 // pred_region
        %s946 = ssub.s32 %s16, 2
        // Predicated region
        $region57: #{tpu_custom_call.1} parent=55 // pred_check
          %p947 = pneg %p202
        $region58: #{tpu_custom_call.1} parent=55 // pred_check_branch
          %949 = sbr.rel (%p947) target = $region60
        $region59: #{tpu_custom_call.1} parent=55 // pred_region
          %s950 = sand.u32 %s187, 1
          %s951 = scalar_lea.sflag [#allocation3], %s950
          %s952 = sand.u32 %s187, 1
          %s953 = smul.addr %s952, 2
          %s954 = scalar_lea.vmem [#allocation2], %s953
          %955 = dma.done %s951, 32
        $region60: #{tpu_custom_call.1} parent=55 // pred_fallthru
          _
      $region56: #{tpu_custom_call.1} parent=5 // pred_fallthru
        _
    $region6: #{tpu_custom_call.1} parent=1 // loop_footer
      %s20 = sadd.s32 1, %s16
    $region7: #{tpu_custom_call.1} parent=1 // loop_footer_branch
      %15 = sbr.rel target = $region3
    $region8: #{tpu_custom_call.1} parent=1 // loop_exit
      _
    %956 = vsyncpa [#allocation3], 1
    %s957 = scalar_lea.sflag [#allocation3], 1
    %958 = vsyncpa %s957, 1

</llo_original>
